<compile_context>
chip_gen: v7x
topology: tpu7x:2x2x1
jax: 0.10.0
libtpu: 0.0.40
codegen_flags: <defaults>
</compile_context>

<pallas_src>
import math

import jax
import jax.numpy as jnp
from jax.experimental import pallas as pl
from jax.experimental.pallas import tpu as pltpu

_VMEM_LIMIT = 48 * 1024 * 1024      # headroom under v7x's 64 MiB physical VMEM


# ---------------------------------------------------------------------------
# Tiling helpers
# ---------------------------------------------------------------------------
def _round_up(n, m):
    return ((n + m - 1) // m) * m


def _pick_tile(n, candidates):
    """Largest candidate dividing n; falls back to the full dim (always legal)."""
    for c in candidates:
        if n % c == 0:
            return c
    return n


def _seq_tiles(length):
    """(padded_length, seq_tile).  The tile divides the padded length, is
    (8,128)-friendly, and is 128/256 for real sequence lengths so the QK^T
    N-dim fills the 256-wide MXU while the flash working set stays inside the
    32 MiB default scoped VMEM budget (v7x-safe; v5e is fine with 128)."""
    if length <= 256:
        padded = _round_up(length, 8)
        return padded, padded
    padded = _round_up(length, 128)
    return padded, (256 if padded % 256 == 0 else 128)


def _head_chunk(num_heads):
    """Heads per flash block: the full H, or an 8-head chunk (block-shape rule:
    second-to-last dim must be a multiple of 8 or the full dim).  Chunking
    bounds VMEM on v7x and gives its two TensorCores more parallel slices."""
    if num_heads <= 8 or num_heads % 8 != 0:
        return num_heads
    return 8


# ---------------------------------------------------------------------------
# Kernel 1: fused QKV projection.  x is read from HBM once per row tile and
# drives three MXU matmuls against VMEM-resident Wq/Wk/Wv (bf16 operands,
# f32 accumulation, f32 bias add).  Outputs are written in [M, C] layout,
# which reshapes for free to [B, L, H, d] -- no HBM transpose afterwards.
# ---------------------------------------------------------------------------
def _qkv_proj_kernel(x_ref, wq_ref, wk_ref, wv_ref, bq_ref, bk_ref, bv_ref,
                     q_ref, k_ref, v_ref):
    x = x_ref[...]
    q = jnp.dot(x, wq_ref[...], preferred_element_type=jnp.float32) + bq_ref[...]
    k = jnp.dot(x, wk_ref[...], preferred_element_type=jnp.float32) + bk_ref[...]
    v = jnp.dot(x, wv_ref[...], preferred_element_type=jnp.float32) + bv_ref[...]
    q_ref[...] = q.astype(q_ref.dtype)
    k_ref[...] = k.astype(k_ref.dtype)
    v_ref[...] = v.astype(v_ref.dtype)


def qkv_projection(x2d, prep):
    """x2d: [M, C] -> (q, k, v) each [M, C] in x2d.dtype (Wq already scaled)."""
    M, C = x2d.shape
    tm = _pick_tile(M, (512, 256, 128, 64, 32, 16, 8))
    isz = jnp.dtype(x2d.dtype).itemsize
    cost = pl.CostEstimate(
        flops=int(2 * M * C * 3 * C),
        transcendentals=0,
        bytes_accessed=int(isz * (4 * M * C + 3 * C * C) + 4 * 3 * C),
    )
    row_spec = pl.BlockSpec((tm, C), lambda i: (i, 0))
    w_spec = pl.BlockSpec((C, C), lambda i: (0, 0))       # resident across M
    b_spec = pl.BlockSpec((1, C), lambda i: (0, 0))
    return pl.pallas_call(
        _qkv_proj_kernel,
        out_shape=tuple(jax.ShapeDtypeStruct((M, C), x2d.dtype) for _ in range(3)),
        grid_spec=pltpu.PrefetchScalarGridSpec(
            num_scalar_prefetch=0,
            grid=(M // tm,),
            in_specs=[row_spec, w_spec, w_spec, w_spec, b_spec, b_spec, b_spec],
            out_specs=[row_spec, row_spec, row_spec],
        ),
        compiler_params=pltpu.CompilerParams(
            dimension_semantics=("parallel",), vmem_limit_bytes=_VMEM_LIMIT),
        cost_estimate=cost,
    )(x2d, prep["wq"], prep["wk"], prep["wv"], prep["bq"], prep["bk"], prep["bv"])


# ---------------------------------------------------------------------------
# Kernel 2: M x N tiled linear (output projection).  bf16 MXU operands,
# f32 accumulation, weight tile resident across the inner N axis.
# ---------------------------------------------------------------------------
def _linear_kernel(x_ref, w_ref, b_ref, o_ref):
    acc = jnp.dot(x_ref[...], w_ref[...], preferred_element_type=jnp.float32)
    o_ref[...] = (acc + b_ref[...]).astype(o_ref.dtype)


def linear(x2d, w, b, out_dtype=None):
    """x2d: [M, Cin] @ w: [Cin, Cout] + b: [1, Cout] (f32) -> [M, Cout]."""
    M, cin = x2d.shape
    cout = w.shape[1]
    out_dtype = out_dtype or x2d.dtype
    tm = _pick_tile(M, (512, 256, 128, 64, 32, 16, 8))
    tn = _pick_tile(cout, (512, 256, 128))
    isz = jnp.dtype(x2d.dtype).itemsize
    cost = pl.CostEstimate(
        flops=int(2 * M * cin * cout),
        transcendentals=0,
        bytes_accessed=int(isz * (M * cin + cin * cout) + 4 * (cout + M * cout)),
    )
    return pl.pallas_call(
        _linear_kernel,
        out_shape=jax.ShapeDtypeStruct((M, cout), out_dtype),
        grid_spec=pltpu.PrefetchScalarGridSpec(
            num_scalar_prefetch=0,
            grid=(M // tm, cout // tn),
            in_specs=[
                pl.BlockSpec((tm, cin), lambda i, j: (i, 0)),   # resident across j
                pl.BlockSpec((cin, tn), lambda i, j: (0, j)),
                pl.BlockSpec((1, tn), lambda i, j: (0, j)),
            ],
            out_specs=pl.BlockSpec((tm, tn), lambda i, j: (i, j)),
        ),
        compiler_params=pltpu.CompilerParams(
            dimension_semantics=("parallel", "parallel"),
            vmem_limit_bytes=_VMEM_LIMIT),
        cost_estimate=cost,
    )(x2d, w, b)


# ---------------------------------------------------------------------------
# Kernel 3: flash attention.
#   q, k, v: [B, Lp, H, d] (q pre-scaled by 1/sqrt(d) via the projection),
#   bias:    [B, 1, Lp]    additive per-key mask (0 = keep, -1e9 = masked/pad).
#   out:     [B, Lp, C]    lane-dense (C = H*d), ready for the o-projection.
# Grid: (B, head-chunks, Lq-tiles, Lk-tiles) with the KV axis as the trailing
# "arbitrary" reduction; online softmax in f32 VMEM scratch.
# ---------------------------------------------------------------------------
def _flash_kernel(q_ref, k_ref, v_ref, bias_ref, o_ref, m_scr, l_scr, acc_scr):
    ki = pl.program_id(3)

    @pl.when(ki == 0)
    def _():
        m_scr[...] = jnp.full_like(m_scr, -jnp.inf)
        l_scr[...] = jnp.zeros_like(l_scr)
        acc_scr[...] = jnp.zeros_like(acc_scr)

    # Blocks arrive token-major (tq, hc, d); bring heads to the front so each
    # head's (tokens, d) slab feeds the MXU directly.  This is a VMEM relayout
    # (XLU path), not an HBM transpose.
    q = jnp.swapaxes(q_ref[0], 0, 1)          # (hc, tq, d)
    k = jnp.swapaxes(k_ref[0], 0, 1)          # (hc, tk, d)
    v = jnp.swapaxes(v_ref[0], 0, 1)          # (hc, tk, d)

    # QK^T without transposing K: contract on d of both operands (MXU direct).
    s = jnp.einsum("hqd,hkd->hqk", q, k, preferred_element_type=jnp.float32)
    s = s + bias_ref[...]                     # (1, 1, tk) additive key bias

    m_prev = m_scr[...]
    m_new = jnp.maximum(m_prev, s.max(axis=-1, keepdims=True))
    alpha = jnp.exp(m_prev - m_new)
    p = jnp.exp(s - m_new)                    # f32 softmax statistics
    l_scr[...] = alpha * l_scr[...] + p.sum(axis=-1, keepdims=True)
    acc_scr[...] = alpha * acc_scr[...] + jnp.einsum(
        "hqk,hkd->hqd", p.astype(v.dtype), v, preferred_element_type=jnp.float32)
    m_scr[...] = m_new

    @pl.when(ki == pl.num_programs(3) - 1)
    def _():
        # Exact divide: runs once per (b, head-chunk, q-tile) -> negligible, and
        # removes the ~1e-3 error of the approx reciprocal.
        o = acc_scr[...] / l_scr[...]                       # (hc, tq, d) f32
        o = jnp.swapaxes(o, 0, 1)                           # (tq, hc, d)
        # Lane-dense store: last dim hc*d (>=128 at real sizes) -> unmasked vst.
        o_ref[0] = o.reshape(o.shape[0], -1).astype(o_ref.dtype)


def flash_sdpa(q, k, v, key_bias, seq_tile):
    """q,k,v: [B,Lp,H,d] (q pre-scaled); key_bias: [B,Lp] f32 -> [B,Lp,H*d]."""
    B, Lp, H, d = q.shape
    C = H * d
    hc = _head_chunk(H)
    bias3 = key_bias.reshape(B, 1, Lp).astype(jnp.float32)
    isz = jnp.dtype(q.dtype).itemsize
    cost = pl.CostEstimate(
        flops=int(4 * B * H * Lp * Lp * d),
        transcendentals=int(B * H * Lp * Lp),
        bytes_accessed=int(isz * 4 * B * Lp * C + 4 * B * Lp),
    )
    return pl.pallas_call(
        _flash_kernel,
        out_shape=jax.ShapeDtypeStruct((B, Lp, C), q.dtype),
        grid_spec=pltpu.PrefetchScalarGridSpec(
            num_scalar_prefetch=0,
            grid=(B, H // hc, Lp // seq_tile, Lp // seq_tile),
            in_specs=[
                pl.BlockSpec((1, seq_tile, hc, d), lambda b, h, qi, ki: (b, qi, h, 0)),
                pl.BlockSpec((1, seq_tile, hc, d), lambda b, h, qi, ki: (b, ki, h, 0)),
                pl.BlockSpec((1, seq_tile, hc, d), lambda b, h, qi, ki: (b, ki, h, 0)),
                pl.BlockSpec((1, 1, seq_tile), lambda b, h, qi, ki: (b, 0, ki)),
            ],
            out_specs=pl.BlockSpec(
                (1, seq_tile, hc * d), lambda b, h, qi, ki: (b, qi, h)),
            scratch_shapes=[
                pltpu.VMEM((hc, seq_tile, 1), jnp.float32),   # running max m
                pltpu.VMEM((hc, seq_tile, 1), jnp.float32),   # running sum l
                pltpu.VMEM((hc, seq_tile, d), jnp.float32),   # f32 accumulator
            ],
        ),
        compiler_params=pltpu.CompilerParams(
            # (B, head-chunks, Lq) parallel -> enough independent slices for the
            # two v7x TensorCores / megacore; KV reduction axis stays last.
            dimension_semantics=("parallel", "parallel", "parallel", "arbitrary"),
            vmem_limit_bytes=_VMEM_LIMIT),
        cost_estimate=cost,
    )(q, k, v, bias3)


# ---------------------------------------------------------------------------
# Weight preparation (once, at load time) and the forward pass.
# ---------------------------------------------------------------------------
def prepare_params(params, num_heads, mxu_dtype=jnp.bfloat16):
    """Fold 1/sqrt(d) into Wq/bq and cast MXU operands once (not per call).
    Biases stay f32 (added to the f32 accumulator)."""
    C = params["wq"].shape[0]
    d = C // num_heads
    scale = 1.0 / math.sqrt(d)
    return {
        "wq": (params["wq"] * scale).astype(mxu_dtype),
        "bq": (params["bq"] * scale).astype(jnp.float32),
        "wk": params["wk"].astype(mxu_dtype),
        "bk": params["bk"].astype(jnp.float32),
        "wv": params["wv"].astype(mxu_dtype),
        "bv": params["bv"].astype(jnp.float32),
        "wo": params["wo"].astype(mxu_dtype),
        "bo": params["bo"].astype(jnp.float32),
    }


def self_attention_forward(prep, x, key_bias, num_heads):
    """x: [B, L, C]; key_bias: [B, L] additive (0 keep / -1e9 masked) -> [B, L, C] f32."""
    B, L, C = x.shape
    H = num_heads
    d = C // H
    cdt = prep["wq"].dtype

    Lp, seq_tile = _seq_tiles(L)
    xp = x.astype(cdt)
    kb = key_bias.astype(jnp.float32)
    if Lp != L:
        xp = jnp.pad(xp, ((0, 0), (0, Lp - L), (0, 0)))
        kb = jnp.pad(kb, ((0, 0), (0, Lp - L)), constant_values=-1e9)

    M = B * Lp
    x2d = xp.reshape(M, C)
    q2d, k2d, v2d = qkv_projection(x2d, prep)          # each [M, C]
    # Free reshapes (no HBM movement): [M, C] -> [B, Lp, H, d].
    q = q2d.reshape(B, Lp, H, d)
    k = k2d.reshape(B, Lp, H, d)
    v = v2d.reshape(B, Lp, H, d)

    o = flash_sdpa(q, k, v, kb, seq_tile)              # [B, Lp, C] lane-dense
    out = linear(o.reshape(M, C), prep["wo"], prep["bo"],
                 out_dtype=jnp.float32).reshape(B, Lp, C)
    if Lp != L:
        out = out[:, :L, :]
    # TODO(synk): dropout omitted (inference mode, p effectively 0.0).
    # TODO(synk): only additive per-key padding masks [B, L] are supported; a
    # dense [B, H, Lq, Lk] attn_mask would need a 4-D bias BlockSpec.
    return out


# ---------------------------------------------------------------------------
# References for checking
# ---------------------------------------------------------------------------
def torch_reference_forward(params, x, key_bias, num_heads):
    """PyTorch-faithful f32 reference (unfused weights, score / sqrt(d))."""
    B, L, C = x.shape
    H = num_heads
    d = C // H
    q = (x @ params["wq"] + params["bq"]).reshape(B, L, H, d).transpose(0, 2, 1, 3)
    k = (x @ params["wk"] + params["bk"]).reshape(B, L, H, d).transpose(0, 2, 1, 3)
    v = (x @ params["wv"] + params["bv"]).reshape(B, L, H, d).transpose(0, 2, 1, 3)
    s = jnp.einsum("bhqd,bhkd->bhqk", q, k) / math.sqrt(d)
    s = s + key_bias[:, None, None, :]
    p = jax.nn.softmax(s, axis=-1)
    o = jnp.einsum("bhqk,bhkd->bhqd", p, v)
    o = o.transpose(0, 2, 1, 3).reshape(B, L, C)
    return o @ params["wo"] + params["bo"]


def matched_precision_reference(prep, x, key_bias, num_heads):
    """Non-flash reference applying the kernel's operand-precision policy
    (cast MXU operands to prep dtype, accumulate in f32, f32 softmax stats)."""
    B, L, C = x.shape
    H = num_heads
    d = C // H
    cdt = prep["wq"].dtype
    f32 = jnp.float32

    def lin(xx, w, b):
        return jnp.dot(xx.astype(cdt), w, preferred_element_type=f32) + b

    xf = x.astype(cdt)
    q = lin(xf, prep["wq"], prep["bq"]).astype(cdt).reshape(B, L, H, d)
    k = lin(xf, prep["wk"], prep["bk"]).astype(cdt).reshape(B, L, H, d)
    v = lin(xf, prep["wv"], prep["bv"]).astype(cdt).reshape(B, L, H, d)
    s = jnp.einsum("bqhd,bkhd->bhqk", q, k, preferred_element_type=f32)
    s = s + key_bias[:, None, None, :].astype(f32)
    m = s.max(axis=-1, keepdims=True)
    p = jnp.exp(s - m)                                  # f32, unnormalized
    o = jnp.einsum("bhqk,bkhd->bhqd", p.astype(cdt), v, preferred_element_type=f32)
    o = o / p.sum(axis=-1, keepdims=True)
    o = o.transpose(0, 2, 1, 3).reshape(B, L, C).astype(cdt)
    return lin(o, prep["wo"], prep["bo"])


# ---------------------------------------------------------------------------
if __name__ == "__main__":
    B, L, C, H = 2, 8, 32, 4

    key = jax.random.PRNGKey(0)
    keys = jax.random.split(key, 10)
    std = 1.0 / math.sqrt(C)
    params = {
        "wq": jax.random.normal(keys[0], (C, C), jnp.float32) * std,
        "bq": jax.random.normal(keys[1], (1, C), jnp.float32) * 0.02,
        "wk": jax.random.normal(keys[2], (C, C), jnp.float32) * std,
        "bk": jax.random.normal(keys[3], (1, C), jnp.float32) * 0.02,
        "wv": jax.random.normal(keys[4], (C, C), jnp.float32) * std,
        "bv": jax.random.normal(keys[5], (1, C), jnp.float32) * 0.02,
        "wo": jax.random.normal(keys[6], (C, C), jnp.float32) * std,
        "bo": jax.random.normal(keys[7], (1, C), jnp.float32) * 0.02,
    }
    x = jax.random.normal(keys[8], (B, L, C), jnp.float32)

    # Per-key padding mask (XLM-RoBERTa style): last 2 keys of batch 1 masked.
    valid = jnp.ones((B, L), jnp.float32).at[1, -2:].set(0.0)
    key_bias = jnp.where(valid > 0, 0.0, -1e9).astype(jnp.float32)      # [B, L]

    # 1) f32 path: strict check against the PyTorch-faithful reference.
    prep32 = prepare_params(params, H, jnp.float32)
    out32 = jax.block_until_ready(self_attention_forward(prep32, x, key_bias, H))
    ref32 = torch_reference_forward(params, x, key_bias, H)
    assert out32.shape == (B, L, C)
    err32 = float(jnp.max(jnp.abs(out32 - ref32)))
    assert err32 < 2e-3, f"f32 path mismatch: {err32}"

    # 2) bf16-MXU path (production config): checked against a reference that
    #    applies the same operand-precision policy (bf16 MXU inputs, f32 accum).
    prep16 = prepare_params(params, H, jnp.bfloat16)
    out16 = jax.block_until_ready(self_attention_forward(prep16, x, key_bias, H))
    ref16 = matched_precision_reference(prep16, x, key_bias, H)
    err16 = float(jnp.max(jnp.abs(out16.astype(jnp.float32) - ref16)))
    assert err16 < 2e-3, f"bf16 path mismatch: {err16}"

    print("KERNEL_OK")
</pallas_src>

<mosaic_0001>
module attributes {stable_mosaic.version = 11 : i64} {
  func.func @_qkv_proj_kernel(%arg0: i32, %arg1: memref<16x32xf32, #tpu.memory_space<vmem>>, %arg2: memref<32x32xf32, #tpu.memory_space<vmem>>, %arg3: memref<32x32xf32, #tpu.memory_space<vmem>>, %arg4: memref<32x32xf32, #tpu.memory_space<vmem>>, %arg5: memref<1x32xf32, #tpu.memory_space<vmem>>, %arg6: memref<1x32xf32, #tpu.memory_space<vmem>>, %arg7: memref<1x32xf32, #tpu.memory_space<vmem>>, %arg8: memref<16x32xf32, #tpu.memory_space<vmem>>, %arg9: memref<16x32xf32, #tpu.memory_space<vmem>>, %arg10: memref<16x32xf32, #tpu.memory_space<vmem>>) attributes {dimension_semantics = [#tpu.dimension_semantics<parallel>], iteration_bounds = array<i64: 1>, scalar_prefetch = 0 : i64, scratch_operands = 0 : i64, tpu.core_type = #tpu.core_type<tc>, window_params = [{transform_indices = @transform_0, window_bounds = array<i64: 16, 32>}, {pipeline_mode = #tpu.pipeline_mode<synchronous>, transform_indices = @transform_1, window_bounds = array<i64: 32, 32>}, {pipeline_mode = #tpu.pipeline_mode<synchronous>, transform_indices = @transform_2, window_bounds = array<i64: 32, 32>}, {pipeline_mode = #tpu.pipeline_mode<synchronous>, transform_indices = @transform_3, window_bounds = array<i64: 32, 32>}, {pipeline_mode = #tpu.pipeline_mode<synchronous>, transform_indices = @transform_4, window_bounds = array<i64: 1, 32>}, {pipeline_mode = #tpu.pipeline_mode<synchronous>, transform_indices = @transform_5, window_bounds = array<i64: 1, 32>}, {pipeline_mode = #tpu.pipeline_mode<synchronous>, transform_indices = @transform_6, window_bounds = array<i64: 1, 32>}, {transform_indices = @transform_7, window_bounds = array<i64: 16, 32>}, {transform_indices = @transform_8, window_bounds = array<i64: 16, 32>}, {transform_indices = @transform_9, window_bounds = array<i64: 16, 32>}]} {
    %c0 = arith.constant 0 : index
    %c0_0 = arith.constant 0 : index
    %0 = vector.load %arg1[%c0, %c0_0] : memref<16x32xf32, #tpu.memory_space<vmem>>, vector<16x32xf32>
    %c0_1 = arith.constant 0 : index
    %c0_2 = arith.constant 0 : index
    %1 = vector.load %arg2[%c0_1, %c0_2] : memref<32x32xf32, #tpu.memory_space<vmem>>, vector<32x32xf32>
    %cst = arith.constant dense<0.000000e+00> : vector<16x32xf32>
    %2 = tpu.matmul %0, %1, %cst {dimension_numbers = #tpu.dot_dimension_numbers<[1], [0], [0], [1], [0, 0, 1, 1], [], []>} : vector<16x32xf32>, vector<32x32xf32>, vector<16x32xf32> -> vector<16x32xf32>
    %c0_3 = arith.constant 0 : index
    %c0_4 = arith.constant 0 : index
    %3 = vector.load %arg5[%c0_3, %c0_4] : memref<1x32xf32, #tpu.memory_space<vmem>>, vector<1x32xf32>
    %4 = vector.broadcast %3 : vector<1x32xf32> to vector<16x32xf32>
    %5 = arith.addf %2, %4 : vector<16x32xf32>
    %c0_5 = arith.constant 0 : index
    %c0_6 = arith.constant 0 : index
    %6 = vector.load %arg3[%c0_5, %c0_6] : memref<32x32xf32, #tpu.memory_space<vmem>>, vector<32x32xf32>
    %cst_7 = arith.constant dense<0.000000e+00> : vector<16x32xf32>
    %7 = tpu.matmul %0, %6, %cst_7 {dimension_numbers = #tpu.dot_dimension_numbers<[1], [0], [0], [1], [0, 0, 1, 1], [], []>} : vector<16x32xf32>, vector<32x32xf32>, vector<16x32xf32> -> vector<16x32xf32>
    %c0_8 = arith.constant 0 : index
    %c0_9 = arith.constant 0 : index
    %8 = vector.load %arg6[%c0_8, %c0_9] : memref<1x32xf32, #tpu.memory_space<vmem>>, vector<1x32xf32>
    %9 = vector.broadcast %8 : vector<1x32xf32> to vector<16x32xf32>
    %10 = arith.addf %7, %9 : vector<16x32xf32>
    %c0_10 = arith.constant 0 : index
    %c0_11 = arith.constant 0 : index
    %11 = vector.load %arg4[%c0_10, %c0_11] : memref<32x32xf32, #tpu.memory_space<vmem>>, vector<32x32xf32>
    %cst_12 = arith.constant dense<0.000000e+00> : vector<16x32xf32>
    %12 = tpu.matmul %0, %11, %cst_12 {dimension_numbers = #tpu.dot_dimension_numbers<[1], [0], [0], [1], [0, 0, 1, 1], [], []>} : vector<16x32xf32>, vector<32x32xf32>, vector<16x32xf32> -> vector<16x32xf32>
    %c0_13 = arith.constant 0 : index
    %c0_14 = arith.constant 0 : index
    %13 = vector.load %arg7[%c0_13, %c0_14] : memref<1x32xf32, #tpu.memory_space<vmem>>, vector<1x32xf32>
    %14 = vector.broadcast %13 : vector<1x32xf32> to vector<16x32xf32>
    %15 = arith.addf %12, %14 : vector<16x32xf32>
    %c0_15 = arith.constant 0 : index
    %c0_16 = arith.constant 0 : index
    %16 = vector.load %arg8[%c0_15, %c0_16] : memref<16x32xf32, #tpu.memory_space<vmem>>, vector<16x32xf32>
    tpu.vector_store %arg8[%c0_15, %c0_16], %5 {strides = array<i32>} : memref<16x32xf32, #tpu.memory_space<vmem>>, vector<16x32xf32>,
    %c0_17 = arith.constant 0 : index
    %c0_18 = arith.constant 0 : index
    %17 = vector.load %arg9[%c0_17, %c0_18] : memref<16x32xf32, #tpu.memory_space<vmem>>, vector<16x32xf32>
    tpu.vector_store %arg9[%c0_17, %c0_18], %10 {strides = array<i32>} : memref<16x32xf32, #tpu.memory_space<vmem>>, vector<16x32xf32>,
    %c0_19 = arith.constant 0 : index
    %c0_20 = arith.constant 0 : index
    %18 = vector.load %arg10[%c0_19, %c0_20] : memref<16x32xf32, #tpu.memory_space<vmem>>, vector<16x32xf32>
    tpu.vector_store %arg10[%c0_19, %c0_20], %15 {strides = array<i32>} : memref<16x32xf32, #tpu.memory_space<vmem>>, vector<16x32xf32>,
    return
  }
  func.func @transform_0(%arg0: i32) -> (i32, i32) {
    %c0_i32 = arith.constant 0 : i32
    %c0_i32_0 = arith.constant 0 : i32
    return %arg0, %c0_i32 : i32, i32
  }
  func.func @transform_1(%arg0: i32) -> (i32, i32) {
    %c0_i32 = arith.constant 0 : i32
    %c0_i32_0 = arith.constant 0 : i32
    %c0_i32_1 = arith.constant 0 : i32
    return %c0_i32, %c0_i32_0 : i32, i32
  }
  func.func @transform_2(%arg0: i32) -> (i32, i32) {
    %c0_i32 = arith.constant 0 : i32
    %c0_i32_0 = arith.constant 0 : i32
    %c0_i32_1 = arith.constant 0 : i32
    return %c0_i32, %c0_i32_0 : i32, i32
  }
  func.func @transform_3(%arg0: i32) -> (i32, i32) {
    %c0_i32 = arith.constant 0 : i32
    %c0_i32_0 = arith.constant 0 : i32
    %c0_i32_1 = arith.constant 0 : i32
    return %c0_i32, %c0_i32_0 : i32, i32
  }
  func.func @transform_4(%arg0: i32) -> (i32, i32) {
    %c0_i32 = arith.constant 0 : i32
    %c0_i32_0 = arith.constant 0 : i32
    %c0_i32_1 = arith.constant 0 : i32
    return %c0_i32, %c0_i32_0 : i32, i32
  }
  func.func @transform_5(%arg0: i32) -> (i32, i32) {
    %c0_i32 = arith.constant 0 : i32
    %c0_i32_0 = arith.constant 0 : i32
    %c0_i32_1 = arith.constant 0 : i32
    return %c0_i32, %c0_i32_0 : i32, i32
  }
  func.func @transform_6(%arg0: i32) -> (i32, i32) {
    %c0_i32 = arith.constant 0 : i32
    %c0_i32_0 = arith.constant 0 : i32
    %c0_i32_1 = arith.constant 0 : i32
    return %c0_i32, %c0_i32_0 : i32, i32
  }
  func.func @transform_7(%arg0: i32) -> (i32, i32) {
    %c0_i32 = arith.constant 0 : i32
    %c0_i32_0 = arith.constant 0 : i32
    return %arg0, %c0_i32 : i32, i32
  }
  func.func @transform_8(%arg0: i32) -> (i32, i32) {
    %c0_i32 = arith.constant 0 : i32
    %c0_i32_0 = arith.constant 0 : i32
    return %arg0, %c0_i32 : i32, i32
  }
  func.func @transform_9(%arg0: i32) -> (i32, i32) {
    %c0_i32 = arith.constant 0 : i32
    %c0_i32_0 = arith.constant 0 : i32
    return %arg0, %c0_i32 : i32, i32
  }
}

</mosaic_0001>

<llo_original>
// kernel: tpu_custom_call.1
$region0: #{tpu_custom_call.1}
  #allocation0 [shape = 'u32[]', space=smem, size = 0x4, offset = 0x4, fixed_abs, tag = 'smem constant byte address 0x4 - core index']
  #allocation1 [shape = 'u32[144,128]{1,0:T(1,128)}', space=vmem, size = 0x12000, scoped, tag = 'internal scratch']
  %s0 = inlined_call_operand.hbm [shape: f32[16,32], index: 0, kind: input, shape index: {}]
  %s1 = inlined_call_operand.hbm [shape: f32[32,32], index: 1, kind: input, shape index: {}]
  %s2 = inlined_call_operand.hbm [shape: f32[32,32], index: 2, kind: input, shape index: {}]
  %s3 = inlined_call_operand.hbm [shape: f32[32,32], index: 3, kind: input, shape index: {}]
  %s4 = inlined_call_operand.vmem [shape: f32[1,32], index: 4, kind: input, shape index: {}]
  %s5 = inlined_call_operand.vmem [shape: f32[1,32], index: 5, kind: input, shape index: {}]
  %s6 = inlined_call_operand.vmem [shape: f32[1,32], index: 6, kind: input, shape index: {}]
  %s7 = inlined_call_operand.hbm [shape: f32[16,32], index: 7, kind: output, shape index: {0}]
  %s8 = inlined_call_operand.hbm [shape: f32[16,32], index: 8, kind: output, shape index: {1}]
  %s9 = inlined_call_operand.hbm [shape: f32[16,32], index: 9, kind: output, shape index: {2}]
  %10 = xla_tuple %s7, %s8, %s9
  %s11 = sld [smem:[#allocation0]]
  $region70: #{tpu_custom_call.1} parent=0
    _
  %s13 = ssub.s32 1, %s11
  %s14 = scalar_select 0, %s13, %s11
  $region1: #{tpu_custom_call.1} parent=0
    #allocation2 [shape = 'u8[8192]{0}', space=vmem, size = 0x2000, scoped, tag = 'input window, operand 0, single buffered']
    #allocation3 [shape = 's32[1]{0}', space=sflag, size = 0x4, scoped, tag = 'scoped memory for tpu_custom_call.1']
    #allocation4 [shape = 's32[1]{0}', space=sflag, size = 0x4, scoped, tag = 'scoped memory for tpu_custom_call.1']
    #allocation5 [shape = 'u8[16384]{0}', space=vmem, size = 0x4000, scoped, tag = 'input window, operand 1, single buffered']
    #allocation6 [shape = 's32[1]{0}', space=sflag, size = 0x4, scoped, tag = 'scoped memory for tpu_custom_call.1']
    #allocation7 [shape = 'u8[16384]{0}', space=vmem, size = 0x4000, scoped, tag = 'input window, operand 2, single buffered']
    #allocation8 [shape = 'u8[16384]{0}', space=vmem, size = 0x4000, scoped, tag = 'input window, operand 3, single buffered']
    #allocation9 [shape = 's32[1]{0}', space=sflag, size = 0x4, scoped, tag = 'scoped memory for tpu_custom_call.1']
    #allocation10 [shape = 'u8[8192]{0}', space=vmem, size = 0x2000, scoped, tag = 'output window, operand 0, single buffered']
    #allocation11 [shape = 'u8[8192]{0}', space=vmem, size = 0x2000, scoped, tag = 'output window, operand 1, single buffered']
    #allocation12 [shape = 's32[1]{0}', space=sflag, size = 0x4, scoped, tag = 'scoped memory for tpu_custom_call.1']
    #allocation13 [shape = 'u8[8192]{0}', space=vmem, size = 0x2000, scoped, tag = 'output window, operand 2, single buffered']
    %15 = vsyncpa [#allocation3], 0
    %16 = vsyncpa [#allocation6], 0
    %17 = vsyncpa [#allocation9], 0
    %18 = vsyncpa [#allocation4], 0
    %19 = vsyncpa [#allocation12], 0
    // Predicated region
    $region2: #{tpu_custom_call.1} parent=1 // pred_check
      _
    $region3: #{tpu_custom_call.1} parent=1 // pred_check_branch
      %21 = sbr.rel (0) target = $region5
    $region4: #{tpu_custom_call.1} parent=1 // pred_region
      %s23 = ssub.s32 256, 256
      %24 = vsyncadd [#allocation3], %s23
      %s25 = sshll.u32 [#allocation2], 4
      %s26 = int_to_ptr.vmem [resolvable:$true] %s25
      %31 = dma.hbm_to_vmem [thread:$0]  %s0, 256, %s26, [#allocation3], 128, 128, 8
    $region5: #{tpu_custom_call.1} parent=1 // pred_fallthru
      _
    // Predicated region
    $region6: #{tpu_custom_call.1} parent=1 // pred_check
      _
    $region7: #{tpu_custom_call.1} parent=1 // pred_check_branch
      %33 = sbr.rel (0) target = $region9
    $region8: #{tpu_custom_call.1} parent=1 // pred_region
      %s35 = ssub.s32 512, 512
      %36 = vsyncadd [#allocation6], %s35
      %s37 = sshll.u32 [#allocation5], 4
      %s38 = int_to_ptr.vmem [resolvable:$true] %s37
      %43 = dma.hbm_to_vmem [thread:$0]  %s1, 512, %s38, [#allocation6], 128, 128, 8
    $region9: #{tpu_custom_call.1} parent=1 // pred_fallthru
      _
    // Predicated region
    $region10: #{tpu_custom_call.1} parent=1 // pred_check
      _
    $region11: #{tpu_custom_call.1} parent=1 // pred_check_branch
      %45 = sbr.rel (0) target = $region13
    $region12: #{tpu_custom_call.1} parent=1 // pred_region
      %s47 = ssub.s32 512, 512
      %48 = vsyncadd [#allocation6], %s47
      %s49 = sshll.u32 [#allocation7], 4
      %s50 = int_to_ptr.vmem [resolvable:$true] %s49
      %55 = dma.hbm_to_vmem [thread:$0]  %s2, 512, %s50, [#allocation6], 128, 128, 8
    $region13: #{tpu_custom_call.1} parent=1 // pred_fallthru
      _
    // Predicated region
    $region14: #{tpu_custom_call.1} parent=1 // pred_check
      _
    $region15: #{tpu_custom_call.1} parent=1 // pred_check_branch
      %57 = sbr.rel (0) target = $region17
    $region16: #{tpu_custom_call.1} parent=1 // pred_region
      %s59 = ssub.s32 512, 512
      %60 = vsyncadd [#allocation9], %s59
      %s61 = sshll.u32 [#allocation8], 4
      %s62 = int_to_ptr.vmem [resolvable:$true] %s61
      %67 = dma.hbm_to_vmem [thread:$0]  %s3, 512, %s62, [#allocation9], 128, 128, 8
    $region17: #{tpu_custom_call.1} parent=1 // pred_fallthru
      _
    // Predicated region
    $region18: #{tpu_custom_call.1} parent=1 // pred_check
      _
    $region19: #{tpu_custom_call.1} parent=1 // pred_check_branch
      %69 = sbr.rel (0) target = $region21
    $region20: #{tpu_custom_call.1} parent=1 // pred_region
      _
    $region21: #{tpu_custom_call.1} parent=1 // pred_fallthru
      _
    // Predicated region
    $region22: #{tpu_custom_call.1} parent=1 // pred_check
      _
    $region23: #{tpu_custom_call.1} parent=1 // pred_check_branch
      %71 = sbr.rel (0) target = $region25
    $region24: #{tpu_custom_call.1} parent=1 // pred_region
      _
    $region25: #{tpu_custom_call.1} parent=1 // pred_fallthru
      _
    // Predicated region
    $region26: #{tpu_custom_call.1} parent=1 // pred_check
      _
    $region27: #{tpu_custom_call.1} parent=1 // pred_check_branch
      %73 = sbr.rel (0) target = $region29
    $region28: #{tpu_custom_call.1} parent=1 // pred_region
      _
    $region29: #{tpu_custom_call.1} parent=1 // pred_fallthru
      _
    // Predicated region
    $region30: #{tpu_custom_call.1} parent=1 // pred_check
      _
    $region31: #{tpu_custom_call.1} parent=1 // pred_check_branch
      %75 = sbr.rel (0) target = $region33
    $region32: #{tpu_custom_call.1} parent=1 // pred_region
      %76 = dma.done [#allocation3], 256
    $region33: #{tpu_custom_call.1} parent=1 // pred_fallthru
      _
    // Predicated region
    $region34: #{tpu_custom_call.1} parent=1 // pred_check
      _
    $region35: #{tpu_custom_call.1} parent=1 // pred_check_branch
      %78 = sbr.rel (0) target = $region37
    $region36: #{tpu_custom_call.1} parent=1 // pred_region
      %79 = dma.done [#allocation6], 512
    $region37: #{tpu_custom_call.1} parent=1 // pred_fallthru
      _
    // Predicated region
    $region38: #{tpu_custom_call.1} parent=1 // pred_check
      _
    $region39: #{tpu_custom_call.1} parent=1 // pred_check_branch
      %81 = sbr.rel (0) target = $region41
    $region40: #{tpu_custom_call.1} parent=1 // pred_region
      %82 = dma.done [#allocation6], 512
    $region41: #{tpu_custom_call.1} parent=1 // pred_fallthru
      _
    // Predicated region
    $region42: #{tpu_custom_call.1} parent=1 // pred_check
      _
    $region43: #{tpu_custom_call.1} parent=1 // pred_check_branch
      %84 = sbr.rel (0) target = $region45
    $region44: #{tpu_custom_call.1} parent=1 // pred_region
      %85 = dma.done [#allocation9], 512
    $region45: #{tpu_custom_call.1} parent=1 // pred_fallthru
      _
    %v86 = vld [vmem:[#allocation2] sm:$0xff]
    %v87 = vld [vmem:[#allocation2 + $0x8] sm:$0xff]
    %v88 = vld [vmem:[#allocation5] sm:$0xff]
    %v89 = vld [vmem:[#allocation5 + $0x8] sm:$0xff]
    %v90 = vld [vmem:[#allocation5 + $0x10] sm:$0xff]
    %v91 = vld [vmem:[#allocation5 + $0x18] sm:$0xff]
    %v92 = vld [vmem:[%s4] sm:$0x1]
    %v94 = vlaneseq
    %v95 = vshrl.u32 %v94, 7
    %v96 = vsub.s32 0, %v95
    %v97 = vrot.slane %v92, %v96
    %vm99 = vcmask 261120
    %v101 = vsel %vm99, %v86, 0
    %v104 = vsel %vm99, %v87, 0
    %106 = vmatprep.subr.mxu0 0.0
    %107 = vmatpush1.msra.mxu0 %v88
    %108 = vmatprep.subr.mxu0 0.0
    %109 = vmatpush1.msra.mxu0 %v89
    %110 = vmatprep.subr.mxu0 0.0
    %111 = vmatpush1.msra.mxu0 %v90
    %112 = vmatprep.subr.mxu0 0.0
    %113 = vmatpush1.msra.mxu0 %v91
    %114 = vmatprep.subr.mxu0 0.0
    %115 = vmatpush1.msra.mxu0 0.0
    %116 = vmatprep.subr.mxu0 0.0
    %117 = vmatpush1.msra.mxu0 0.0
    %118 = vmatprep.subr.mxu0 0.0
    %119 = vmatpush1.msra.mxu0 0.0
    %120 = vmatprep.subr.mxu0 0.0
    %121 = vmatpush1.msra.mxu0 0.0
    %122 = vmatprep.subr.mxu0 0.0
    %123 = vmatpush1.msra.mxu0 0.0
    %124 = vmatprep.subr.mxu0 0.0
    %125 = vmatpush1.msra.mxu0 0.0
    %126 = vmatprep.subr.mxu0 0.0
    %127 = vmatpush1.msra.mxu0 0.0
    %128 = vmatprep.subr.mxu0 0.0
    %129 = vmatpush1.msra.mxu0 0.0
    %130 = vmatprep.subr.mxu0 0.0
    %131 = vmatpush1.msra.mxu0 0.0
    %132 = vmatprep.subr.mxu0 0.0
    %133 = vmatpush1.msra.mxu0 0.0
    %134 = vmatprep.subr.mxu0 0.0
    %135 = vmatpush1.msra.mxu0 0.0
    %136 = vmatprep.subr.mxu0 0.0
    %137 = vmatpush1.msra.mxu0 0.0
    %138 = vmatprep.subr.mxu0 0.0
    %139 = vmatpush1.msra.mxu0 0.0
    %140 = vmatprep.subr.mxu0 0.0
    %141 = vmatpush1.msra.mxu0 0.0
    %142 = vmatprep.subr.mxu0 0.0
    %143 = vmatpush1.msra.mxu0 0.0
    %144 = vmatprep.subr.mxu0 0.0
    %145 = vmatpush1.msra.mxu0 0.0
    %146 = vmatprep.subr.mxu0 0.0
    %147 = vmatpush1.msra.mxu0 0.0
    %148 = vmatprep.subr.mxu0 0.0
    %149 = vmatpush1.msra.mxu0 0.0
    %150 = vmatprep.subr.mxu0 0.0
    %151 = vmatpush1.msra.mxu0 0.0
    %152 = vmatprep.subr.mxu0 0.0
    %153 = vmatpush1.msra.mxu0 0.0
    %154 = vmatprep.subr.mxu0 0.0
    %155 = vmatpush1.msra.mxu0 0.0
    %156 = vmatprep.subr.mxu0 0.0
    %157 = vmatpush1.msra.mxu0 0.0
    %158 = vmatprep.subr.mxu0 0.0
    %159 = vmatpush1.msra.mxu0 0.0
    %160 = vmatprep.subr.mxu0 0.0
    %161 = vmatpush1.msra.mxu0 0.0
    %162 = vmatprep.subr.mxu0 0.0
    %163 = vmatpush1.msra.mxu0 0.0
    %164 = vmatprep.subr.mxu0 0.0
    %165 = vmatpush1.msra.mxu0 0.0
    %166 = vmatprep.subr.mxu0 0.0
    %167 = vmatpush1.msra.mxu0 0.0
    %168 = vmatprep.subr.mxu0 0.0
    %169 = vmatpush1.msra.mxu0 0.0
    %170 = vmatprep.mubr.f32.mxu0 0.0
    %171 = vmatmul.mubr.f32.gmra.mrb[0].mxu0 %v101
    %v172 = vpop.f32.mrb[0].mxu0
    %v173 = vadd.f32 %v97, %v172
    %v174 = vpop.f32.mrb[0].mxu0
    %175 = vmatprep.mubr.f32.mxu0 0.0
    %176 = vmatmul.mubr.f32.gmra.mrb[0].mxu0 %v104
    %v177 = vpop.f32.mrb[0].mxu0
    %v178 = vadd.f32 %v97, %v177
    %v179 = vpop.f32.mrb[0].mxu0
    %180 = vdwg.mxu0
    %v181 = vld [vmem:[#allocation7] sm:$0xff]
    %v182 = vld [vmem:[#allocation7 + $0x8] sm:$0xff]
    %v183 = vld [vmem:[#allocation7 + $0x10] sm:$0xff]
    %v184 = vld [vmem:[#allocation7 + $0x18] sm:$0xff]
    %v185 = vld [vmem:[%s5] sm:$0x1]
    %v187 = vlaneseq
    %v188 = vshrl.u32 %v187, 7
    %v189 = vsub.s32 0, %v188
    %v190 = vrot.slane %v185, %v189
    %192 = vmatprep.subr.mxu0 0.0
    %193 = vmatpush1.msra.mxu0 %v181
    %194 = vmatprep.subr.mxu0 0.0
    %195 = vmatpush1.msra.mxu0 %v182
    %196 = vmatprep.subr.mxu0 0.0
    %197 = vmatpush1.msra.mxu0 %v183
    %198 = vmatprep.subr.mxu0 0.0
    %199 = vmatpush1.msra.mxu0 %v184
    %200 = vmatprep.subr.mxu0 0.0
    %201 = vmatpush1.msra.mxu0 0.0
    %202 = vmatprep.subr.mxu0 0.0
    %203 = vmatpush1.msra.mxu0 0.0
    %204 = vmatprep.subr.mxu0 0.0
    %205 = vmatpush1.msra.mxu0 0.0
    %206 = vmatprep.subr.mxu0 0.0
    %207 = vmatpush1.msra.mxu0 0.0
    %208 = vmatprep.subr.mxu0 0.0
    %209 = vmatpush1.msra.mxu0 0.0
    %210 = vmatprep.subr.mxu0 0.0
    %211 = vmatpush1.msra.mxu0 0.0
    %212 = vmatprep.subr.mxu0 0.0
    %213 = vmatpush1.msra.mxu0 0.0
    %214 = vmatprep.subr.mxu0 0.0
    %215 = vmatpush1.msra.mxu0 0.0
    %216 = vmatprep.subr.mxu0 0.0
    %217 = vmatpush1.msra.mxu0 0.0
    %218 = vmatprep.subr.mxu0 0.0
    %219 = vmatpush1.msra.mxu0 0.0
    %220 = vmatprep.subr.mxu0 0.0
    %221 = vmatpush1.msra.mxu0 0.0
    %222 = vmatprep.subr.mxu0 0.0
    %223 = vmatpush1.msra.mxu0 0.0
    %224 = vmatprep.subr.mxu0 0.0
    %225 = vmatpush1.msra.mxu0 0.0
    %226 = vmatprep.subr.mxu0 0.0
    %227 = vmatpush1.msra.mxu0 0.0
    %228 = vmatprep.subr.mxu0 0.0
    %229 = vmatpush1.msra.mxu0 0.0
    %230 = vmatprep.subr.mxu0 0.0
    %231 = vmatpush1.msra.mxu0 0.0
    %232 = vmatprep.subr.mxu0 0.0
    %233 = vmatpush1.msra.mxu0 0.0
    %234 = vmatprep.subr.mxu0 0.0
    %235 = vmatpush1.msra.mxu0 0.0
    %236 = vmatprep.subr.mxu0 0.0
    %237 = vmatpush1.msra.mxu0 0.0
    %238 = vmatprep.subr.mxu0 0.0
    %239 = vmatpush1.msra.mxu0 0.0
    %240 = vmatprep.subr.mxu0 0.0
    %241 = vmatpush1.msra.mxu0 0.0
    %242 = vmatprep.subr.mxu0 0.0
    %243 = vmatpush1.msra.mxu0 0.0
    %244 = vmatprep.subr.mxu0 0.0
    %245 = vmatpush1.msra.mxu0 0.0
    %246 = vmatprep.subr.mxu0 0.0
    %247 = vmatpush1.msra.mxu0 0.0
    %248 = vmatprep.subr.mxu0 0.0
    %249 = vmatpush1.msra.mxu0 0.0
    %250 = vmatprep.subr.mxu0 0.0
    %251 = vmatpush1.msra.mxu0 0.0
    %252 = vmatprep.subr.mxu0 0.0
    %253 = vmatpush1.msra.mxu0 0.0
    %254 = vmatprep.subr.mxu0 0.0
    %255 = vmatpush1.msra.mxu0 0.0
    %256 = vmatprep.mubr.f32.mxu0 0.0
    %257 = vmatmul.mubr.f32.gmra.mrb[0].mxu0 %v101
    %v258 = vpop.f32.mrb[0].mxu0
    %v259 = vadd.f32 %v190, %v258
    %v260 = vpop.f32.mrb[0].mxu0
    %261 = vmatprep.mubr.f32.mxu0 0.0
    %262 = vmatmul.mubr.f32.gmra.mrb[0].mxu0 %v104
    %v263 = vpop.f32.mrb[0].mxu0
    %v264 = vadd.f32 %v190, %v263
    %v265 = vpop.f32.mrb[0].mxu0
    %266 = vdwg.mxu0
    %v267 = vld [vmem:[#allocation8] sm:$0xff]
    %v268 = vld [vmem:[#allocation8 + $0x8] sm:$0xff]
    %v269 = vld [vmem:[#allocation8 + $0x10] sm:$0xff]
    %v270 = vld [vmem:[#allocation8 + $0x18] sm:$0xff]
    %v271 = vld [vmem:[%s6] sm:$0x1]
    %v273 = vlaneseq
    %v274 = vshrl.u32 %v273, 7
    %v275 = vsub.s32 0, %v274
    %v276 = vrot.slane %v271, %v275
    %278 = vmatprep.subr.mxu0 0.0
    %279 = vmatpush1.msra.mxu0 %v267
    %280 = vmatprep.subr.mxu0 0.0
    %281 = vmatpush1.msra.mxu0 %v268
    %282 = vmatprep.subr.mxu0 0.0
    %283 = vmatpush1.msra.mxu0 %v269
    %284 = vmatprep.subr.mxu0 0.0
    %285 = vmatpush1.msra.mxu0 %v270
    %286 = vmatprep.subr.mxu0 0.0
    %287 = vmatpush1.msra.mxu0 0.0
    %288 = vmatprep.subr.mxu0 0.0
    %289 = vmatpush1.msra.mxu0 0.0
    %290 = vmatprep.subr.mxu0 0.0
    %291 = vmatpush1.msra.mxu0 0.0
    %292 = vmatprep.subr.mxu0 0.0
    %293 = vmatpush1.msra.mxu0 0.0
    %294 = vmatprep.subr.mxu0 0.0
    %295 = vmatpush1.msra.mxu0 0.0
    %296 = vmatprep.subr.mxu0 0.0
    %297 = vmatpush1.msra.mxu0 0.0
    %298 = vmatprep.subr.mxu0 0.0
    %299 = vmatpush1.msra.mxu0 0.0
    %300 = vmatprep.subr.mxu0 0.0
    %301 = vmatpush1.msra.mxu0 0.0
    %302 = vmatprep.subr.mxu0 0.0
    %303 = vmatpush1.msra.mxu0 0.0
    %304 = vmatprep.subr.mxu0 0.0
    %305 = vmatpush1.msra.mxu0 0.0
    %306 = vmatprep.subr.mxu0 0.0
    %307 = vmatpush1.msra.mxu0 0.0
    %308 = vmatprep.subr.mxu0 0.0
    %309 = vmatpush1.msra.mxu0 0.0
    %310 = vmatprep.subr.mxu0 0.0
    %311 = vmatpush1.msra.mxu0 0.0
    %312 = vmatprep.subr.mxu0 0.0
    %313 = vmatpush1.msra.mxu0 0.0
    %314 = vmatprep.subr.mxu0 0.0
    %315 = vmatpush1.msra.mxu0 0.0
    %316 = vmatprep.subr.mxu0 0.0
    %317 = vmatpush1.msra.mxu0 0.0
    %318 = vmatprep.subr.mxu0 0.0
    %319 = vmatpush1.msra.mxu0 0.0
    %320 = vmatprep.subr.mxu0 0.0
    %321 = vmatpush1.msra.mxu0 0.0
    %322 = vmatprep.subr.mxu0 0.0
    %323 = vmatpush1.msra.mxu0 0.0
    %324 = vmatprep.subr.mxu0 0.0
    %325 = vmatpush1.msra.mxu0 0.0
    %326 = vmatprep.subr.mxu0 0.0
    %327 = vmatpush1.msra.mxu0 0.0
    %328 = vmatprep.subr.mxu0 0.0
    %329 = vmatpush1.msra.mxu0 0.0
    %330 = vmatprep.subr.mxu0 0.0
    %331 = vmatpush1.msra.mxu0 0.0
    %332 = vmatprep.subr.mxu0 0.0
    %333 = vmatpush1.msra.mxu0 0.0
    %334 = vmatprep.subr.mxu0 0.0
    %335 = vmatpush1.msra.mxu0 0.0
    %336 = vmatprep.subr.mxu0 0.0
    %337 = vmatpush1.msra.mxu0 0.0
    %338 = vmatprep.subr.mxu0 0.0
    %339 = vmatpush1.msra.mxu0 0.0
    %340 = vmatprep.subr.mxu0 0.0
    %341 = vmatpush1.msra.mxu0 0.0
    %342 = vmatprep.mubr.f32.mxu0 0.0
    %343 = vmatmul.mubr.f32.gmra.mrb[0].mxu0 %v101
    %v344 = vpop.f32.mrb[0].mxu0
    %v345 = vadd.f32 %v276, %v344
    %v346 = vpop.f32.mrb[0].mxu0
    %347 = vmatprep.mubr.f32.mxu0 0.0
    %348 = vmatmul.mubr.f32.gmra.mrb[0].mxu0 %v104
    %v349 = vpop.f32.mrb[0].mxu0
    %v350 = vadd.f32 %v276, %v349
    %v351 = vpop.f32.mrb[0].mxu0
    %352 = vdwg.mxu0
    %353 = vst.msk [vmem:[#allocation10] sm:$0xff] %vm99, %v173
    %354 = vst.msk [vmem:[#allocation10 + $0x8] sm:$0xff] %vm99, %v178
    %355 = vst.msk [vmem:[#allocation11] sm:$0xff] %vm99, %v259
    %356 = vst.msk [vmem:[#allocation11 + $0x8] sm:$0xff] %vm99, %v264
    %357 = vst.msk [vmem:[#allocation13] sm:$0xff] %vm99, %v345
    %358 = vst.msk [vmem:[#allocation13 + $0x8] sm:$0xff] %vm99, %v350
    // Predicated region
    $region46: #{tpu_custom_call.1} parent=1 // pred_check
      _
    $region47: #{tpu_custom_call.1} parent=1 // pred_check_branch
      %360 = sbr.rel (0) target = $region49
    $region48: #{tpu_custom_call.1} parent=1 // pred_region
      %s362 = ssub.s32 256, 256
      %363 = vsyncadd [#allocation4], %s362
      %s364 = sshll.u32 [#allocation10], 4
      %s365 = int_to_ptr.vmem [resolvable:$true] %s364
      %370 = dma.vmem_to_hbm [thread:$0]  %s365, 256, %s7, [#allocation4], 128, 128, 8
    $region49: #{tpu_custom_call.1} parent=1 // pred_fallthru
      _
    // Predicated region
    $region50: #{tpu_custom_call.1} parent=1 // pred_check
      _
    $region51: #{tpu_custom_call.1} parent=1 // pred_check_branch
      %372 = sbr.rel (0) target = $region53
    $region52: #{tpu_custom_call.1} parent=1 // pred_region
      %s374 = ssub.s32 256, 256
      %375 = vsyncadd [#allocation12], %s374
      %s376 = sshll.u32 [#allocation11], 4
      %s377 = int_to_ptr.vmem [resolvable:$true] %s376
      %382 = dma.vmem_to_hbm [thread:$0]  %s377, 256, %s8, [#allocation12], 128, 128, 8
    $region53: #{tpu_custom_call.1} parent=1 // pred_fallthru
      _
    // Predicated region
    $region54: #{tpu_custom_call.1} parent=1 // pred_check
      _
    $region55: #{tpu_custom_call.1} parent=1 // pred_check_branch
      %384 = sbr.rel (0) target = $region57
    $region56: #{tpu_custom_call.1} parent=1 // pred_region
      %s386 = ssub.s32 256, 256
      %387 = vsyncadd [#allocation12], %s386
      %s388 = sshll.u32 [#allocation13], 4
      %s389 = int_to_ptr.vmem [resolvable:$true] %s388
      %394 = dma.vmem_to_hbm [thread:$0]  %s389, 256, %s9, [#allocation12], 128, 128, 8
    $region57: #{tpu_custom_call.1} parent=1 // pred_fallthru
      _
    // Predicated region
    $region58: #{tpu_custom_call.1} parent=1 // pred_check
      _
    $region59: #{tpu_custom_call.1} parent=1 // pred_check_branch
      %396 = sbr.rel (0) target = $region61
    $region60: #{tpu_custom_call.1} parent=1 // pred_region
      %397 = dma.done [#allocation4], 256
    $region61: #{tpu_custom_call.1} parent=1 // pred_fallthru
      _
    // Predicated region
    $region62: #{tpu_custom_call.1} parent=1 // pred_check
      _
    $region63: #{tpu_custom_call.1} parent=1 // pred_check_branch
      %399 = sbr.rel (0) target = $region65
    $region64: #{tpu_custom_call.1} parent=1 // pred_region
      %400 = dma.done [#allocation12], 256
    $region65: #{tpu_custom_call.1} parent=1 // pred_fallthru
      _
    // Predicated region
    $region66: #{tpu_custom_call.1} parent=1 // pred_check
      _
    $region67: #{tpu_custom_call.1} parent=1 // pred_check_branch
      %402 = sbr.rel (0) target = $region69
    $region68: #{tpu_custom_call.1} parent=1 // pred_region
      %403 = dma.done [#allocation12], 256
    $region69: #{tpu_custom_call.1} parent=1 // pred_fallthru
      _
    %404 = vsyncpa [#allocation3], 1
    %405 = vsyncpa [#allocation6], 1
    %406 = vsyncpa [#allocation9], 1
    %407 = vsyncpa [#allocation4], 1
    %408 = vsyncpa [#allocation12], 1

</llo_original>
